<compile_context>
chip_gen: v5e
topology: v5e:2x2
jax: 0.10.0
libtpu: 0.0.40
codegen_flags: <defaults>
</compile_context>

<pallas_src>
import jax
import jax.numpy as jnp
from jax.experimental import pallas as pl
from jax.experimental.pallas import tpu as pltpu


def _cdiv(a, b):
    return -(-a // b)


def _round_up(n, m):
    return _cdiv(n, m) * m


def qnetwork_kernel(x_ref, a_ref, w1x_ref, w1a_ref, b1_ref,
                    w2_ref, b2_ref, w3_ref, b3_ref, o_ref):
    # x:   (TB, OBS) f32      a:   (TB, ACT) f32
    # w1x: (OBS, H)  bf16     w1a: (ACT, H)  bf16    b1: (1, H) f32
    # w2:  (H, H)    bf16     b2:  (1, H)    f32
    # w3:  (1, H)    f32      b3:  (1, 1)    f32 (SMEM scalar)
    # o:   (TB//128, 128) f32 -- Q values with batch along the lane axis.
    xb = x_ref[...].astype(jnp.bfloat16)
    ab = a_ref[...].astype(jnp.bfloat16)

    # fc1 (+ fused concat) + relu -- two MXU matmuls, f32 accumulation.
    h1 = jnp.dot(xb, w1x_ref[...], preferred_element_type=jnp.float32)
    h1 = h1 + jnp.dot(ab, w1a_ref[...], preferred_element_type=jnp.float32)
    h1 = jnp.maximum(h1 + b1_ref[...], 0.0)

    # fc2 + relu.
    h2 = jnp.dot(h1.astype(jnp.bfloat16), w2_ref[...],
                 preferred_element_type=jnp.float32)
    h2 = jnp.maximum(h2 + b2_ref[...], 0.0)

    # fc3: VPU multiply against the (1, H) weight row; fold lane halves on the
    # VPU so only one 128-lane XLU reduce per vreg remains.
    p = h2 * w3_ref[...]                                    # (TB, H) f32
    width = p.shape[-1]
    while width > 128:
        half = width // 2
        p = p[:, :half] + p[:, half:width]                  # VPU add of lane halves
        width = half
    q = jnp.sum(p, axis=-1, keepdims=True) + b3_ref[0, 0]   # (TB, 1) f32

    # Lane-dense store: move per-row Q scalars from the sublane axis to the lane
    # axis.  Per 128-row group: broadcast the column across lanes, mask with the
    # identity pattern, reduce over sublanes.  All plain VPU / sublane-reduce ops.
    lanes = o_ref.shape[-1]                                 # 128
    eye = (jax.lax.broadcasted_iota(jnp.int32, (lanes, lanes), 0)
           == jax.lax.broadcasted_iota(jnp.int32, (lanes, lanes), 1)
           ).astype(jnp.float32)
    for g in range(o_ref.shape[0]):                         # TB//128 groups (static)
        qg = q[g * lanes:(g + 1) * lanes, :]                # (128, 1)
        o_ref[g, :] = jnp.sum(qg * eye, axis=0).astype(o_ref.dtype)


def _pick_tile(B):
    # Single ragged tile (128-multiple: fits v5e's 4x128x128 MXU with minimal
    # padding waste) for small/medium batches; 1024/2048-row tiles for large
    # batches so per-step overhead is amortized while keeping >=2 grid steps for
    # v7x's two TensorCores.  Multi-tile TB is a multiple of 1024 so the
    # (TB//128, 128) output block stays (8,128)-legal.
    if B <= 1024:
        return _round_up(B, 128)
    return min(_round_up(_cdiv(B, 2), 1024), 2048)


def qnetwork_forward(x, a, params):
    """x: (B, OBS) f32, a: (B, ACT) f32 -> (B, 1) f32 Q-values."""
    w1x, w1a, b1, w2, b2, w3, b3 = params
    B, OBS = x.shape
    ACT = a.shape[1]
    H = w2.shape[0]

    TB = _pick_tile(B)
    G = _cdiv(B, TB)                 # ragged final block handled by Pallas
    out_rows = G * (TB // 128)       # lane-dense output: 128 Q values per row

    batch_map = lambda i: (i, 0)     # per-tile obs/act/out
    const_map = lambda i: (0, 0)     # weights/biases: resident in VMEM across tiles

    out = pl.pallas_call(
        qnetwork_kernel,
        out_shape=jax.ShapeDtypeStruct((out_rows, 128), jnp.float32),
        grid_spec=pltpu.PrefetchScalarGridSpec(
            num_scalar_prefetch=0,
            grid=(G,),
            in_specs=[
                pl.BlockSpec((TB, OBS), batch_map),          # obs tile (ragged ok)
                pl.BlockSpec((TB, ACT), batch_map),          # act tile (ragged ok)
                pl.BlockSpec((OBS, H), const_map),           # w1[:OBS]  (bf16)
                pl.BlockSpec((ACT, H), const_map),           # w1[OBS:]  (bf16)
                pl.BlockSpec((1, H), const_map),             # b1
                pl.BlockSpec((H, H), const_map),             # w2        (bf16)
                pl.BlockSpec((1, H), const_map),             # b2
                pl.BlockSpec((1, H), const_map),             # w3 row    (f32)
                pl.BlockSpec(memory_space=pltpu.MemorySpace.SMEM),  # b3 scalar
            ],
            out_specs=pl.BlockSpec((TB // 128, 128), batch_map),
        ),
        compiler_params=pltpu.CompilerParams(
            dimension_semantics=("parallel",),
        ),
    )(x, a, w1x, w1a, b1, w2, b2, w3, b3)
    return out.reshape(-1, 1)[:B]


def init_params(key, obs_dim, act_dim, hidden=256):
    """torch.nn.Linear-style init (U(-1/sqrt(fan_in), +1/sqrt(fan_in))), laid out
    for the kernel: fc1 split along (obs|act) rows, big weights in bf16,
    fc3 weight as an f32 row vector, biases in f32."""
    ks = jax.random.split(key, 6)

    def lin(kw, kb, fan_in, fan_out):
        bound = 1.0 / (float(fan_in) ** 0.5)
        w = jax.random.uniform(kw, (fan_in, fan_out), jnp.float32, -bound, bound)
        b = jax.random.uniform(kb, (1, fan_out), jnp.float32, -bound, bound)
        return w, b

    in_dim = obs_dim + act_dim
    w1, b1 = lin(ks[0], ks[1], in_dim, hidden)
    w2, b2 = lin(ks[2], ks[3], hidden, hidden)
    w3, b3 = lin(ks[4], ks[5], hidden, 1)

    w1x = w1[:obs_dim].astype(jnp.bfloat16)
    w1a = w1[obs_dim:].astype(jnp.bfloat16)
    w2b = w2.astype(jnp.bfloat16)
    w3r = w3.T                     # (1, hidden) f32
    return (w1x, w1a, b1, w2b, b2, w3r, b3)


def reference_forward(x, a, params):
    """Pure-JAX reference mirroring the kernel's numerics (bf16 matmuls, f32 acc)."""
    w1x, w1a, b1, w2, b2, w3, b3 = params
    xb = x.astype(jnp.bfloat16)
    ab = a.astype(jnp.bfloat16)
    h1 = (jnp.dot(xb, w1x, preferred_element_type=jnp.float32)
          + jnp.dot(ab, w1a, preferred_element_type=jnp.float32))
    h1 = jnp.maximum(h1 + b1, 0.0)
    h2 = jnp.dot(h1.astype(jnp.bfloat16), w2, preferred_element_type=jnp.float32)
    h2 = jnp.maximum(h2 + b2, 0.0)
    return jnp.sum(h2 * w3, axis=-1, keepdims=True) + b3[0, 0]


if __name__ == "__main__":
    key = jax.random.PRNGKey(0)
    k_obs, k_act, k_param = jax.random.split(key, 3)

    OBS = 16      # flattened single_observation_space
    ACT = 8       # single_action_space
    HIDDEN = 256  # fixed by the module (fc2: 256 -> 256)

    params = init_params(k_param, OBS, ACT, HIDDEN)

    # B=8    : single ragged 128-row tile
    # B=300  : single ragged 384-row tile (no XLA pad, tail discarded)
    # B=1500 : two 1024-row tiles -> multi-step "parallel" grid, resident weights
    for i, B in enumerate((8, 300, 1500)):
        x = jax.random.normal(jax.random.fold_in(k_obs, i), (B, OBS), jnp.float32)
        a = jax.random.normal(jax.random.fold_in(k_act, i), (B, ACT), jnp.float32)
        q = qnetwork_forward(x, a, params)
        jax.block_until_ready(q)
        assert q.shape == (B, 1), (q.shape, B)
        ref = reference_forward(x, a, params)
        assert jnp.allclose(q, ref, atol=2e-3, rtol=2e-3), \
            f"mismatch vs reference (B={B})"

    print("KERNEL_OK")
</pallas_src>

<mosaic_0001>
module attributes {stable_mosaic.version = 11 : i64} {
  func.func @qnetwork_kernel(%arg0: i32, %arg1: memref<128x16xf32, #tpu.memory_space<vmem>>, %arg2: memref<128x8xf32, #tpu.memory_space<vmem>>, %arg3: memref<16x256xbf16, #tpu.memory_space<vmem>>, %arg4: memref<8x256xbf16, #tpu.memory_space<vmem>>, %arg5: memref<1x256xf32, #tpu.memory_space<vmem>>, %arg6: memref<256x256xbf16, #tpu.memory_space<vmem>>, %arg7: memref<1x256xf32, #tpu.memory_space<vmem>>, %arg8: memref<1x256xf32, #tpu.memory_space<vmem>>, %arg9: memref<1x1xf32, #tpu.memory_space<smem>>, %arg10: memref<1x128xf32, #tpu.memory_space<vmem>>) attributes {dimension_semantics = [#tpu.dimension_semantics<parallel>], iteration_bounds = array<i64: 1>, scalar_prefetch = 0 : i64, scratch_operands = 0 : i64, tpu.core_type = #tpu.core_type<tc>, window_params = [{transform_indices = @transform_0, window_bounds = array<i64: 128, 16>}, {transform_indices = @transform_1, window_bounds = array<i64: 128, 8>}, {pipeline_mode = #tpu.pipeline_mode<synchronous>, transform_indices = @transform_2, window_bounds = array<i64: 16, 256>}, {pipeline_mode = #tpu.pipeline_mode<synchronous>, transform_indices = @transform_3, window_bounds = array<i64: 8, 256>}, {pipeline_mode = #tpu.pipeline_mode<synchronous>, transform_indices = @transform_4, window_bounds = array<i64: 1, 256>}, {pipeline_mode = #tpu.pipeline_mode<synchronous>, transform_indices = @transform_5, window_bounds = array<i64: 256, 256>}, {pipeline_mode = #tpu.pipeline_mode<synchronous>, transform_indices = @transform_6, window_bounds = array<i64: 1, 256>}, {pipeline_mode = #tpu.pipeline_mode<synchronous>, transform_indices = @transform_7, window_bounds = array<i64: 1, 256>}, {transform_indices = @transform_8, window_bounds = array<i64: 1, 1>}, {transform_indices = @transform_9, window_bounds = array<i64: 1, 128>}]} {
    %c0 = arith.constant 0 : index
    %c0_0 = arith.constant 0 : index
    %0 = vector.load %arg1[%c0, %c0_0] : memref<128x16xf32, #tpu.memory_space<vmem>>, vector<128x16xf32>
    %1 = arith.truncf %0 : vector<128x16xf32> to vector<128x16xbf16>
    %c0_1 = arith.constant 0 : index
    %c0_2 = arith.constant 0 : index
    %2 = vector.load %arg2[%c0_1, %c0_2] : memref<128x8xf32, #tpu.memory_space<vmem>>, vector<128x8xf32>
    %3 = arith.truncf %2 : vector<128x8xf32> to vector<128x8xbf16>
    %c0_3 = arith.constant 0 : index
    %c0_4 = arith.constant 0 : index
    %4 = vector.load %arg3[%c0_3, %c0_4] : memref<16x256xbf16, #tpu.memory_space<vmem>>, vector<16x256xbf16>
    %cst = arith.constant dense<0.000000e+00> : vector<128x256xf32>
    %5 = tpu.matmul %1, %4, %cst {dimension_numbers = #tpu.dot_dimension_numbers<[1], [0], [0], [1], [0, 0, 1, 1], [], []>} : vector<128x16xbf16>, vector<16x256xbf16>, vector<128x256xf32> -> vector<128x256xf32>
    %c0_5 = arith.constant 0 : index
    %c0_6 = arith.constant 0 : index
    %6 = vector.load %arg4[%c0_5, %c0_6] : memref<8x256xbf16, #tpu.memory_space<vmem>>, vector<8x256xbf16>
    %cst_7 = arith.constant dense<0.000000e+00> : vector<128x256xf32>
    %7 = tpu.matmul %3, %6, %cst_7 {dimension_numbers = #tpu.dot_dimension_numbers<[1], [0], [0], [1], [0, 0, 1, 1], [], []>} : vector<128x8xbf16>, vector<8x256xbf16>, vector<128x256xf32> -> vector<128x256xf32>
    %8 = arith.addf %5, %7 : vector<128x256xf32>
    %c0_8 = arith.constant 0 : index
    %c0_9 = arith.constant 0 : index
    %9 = vector.load %arg5[%c0_8, %c0_9] : memref<1x256xf32, #tpu.memory_space<vmem>>, vector<1x256xf32>
    %10 = vector.broadcast %9 : vector<1x256xf32> to vector<128x256xf32>
    %11 = arith.addf %8, %10 : vector<128x256xf32>
    %cst_10 = arith.constant 0.000000e+00 : f32
    %12 = vector.broadcast %cst_10 : f32 to vector<128x256xf32>
    %13 = arith.maximumf %11, %12 : vector<128x256xf32>
    %14 = arith.truncf %13 : vector<128x256xf32> to vector<128x256xbf16>
    %c0_11 = arith.constant 0 : index
    %c0_12 = arith.constant 0 : index
    %15 = vector.load %arg6[%c0_11, %c0_12] : memref<256x256xbf16, #tpu.memory_space<vmem>>, vector<256x256xbf16>
    %cst_13 = arith.constant dense<0.000000e+00> : vector<128x256xf32>
    %16 = tpu.matmul %14, %15, %cst_13 {dimension_numbers = #tpu.dot_dimension_numbers<[1], [0], [0], [1], [0, 0, 1, 1], [], []>} : vector<128x256xbf16>, vector<256x256xbf16>, vector<128x256xf32> -> vector<128x256xf32>
    %c0_14 = arith.constant 0 : index
    %c0_15 = arith.constant 0 : index
    %17 = vector.load %arg7[%c0_14, %c0_15] : memref<1x256xf32, #tpu.memory_space<vmem>>, vector<1x256xf32>
    %18 = vector.broadcast %17 : vector<1x256xf32> to vector<128x256xf32>
    %19 = arith.addf %16, %18 : vector<128x256xf32>
    %cst_16 = arith.constant 0.000000e+00 : f32
    %20 = vector.broadcast %cst_16 : f32 to vector<128x256xf32>
    %21 = arith.maximumf %19, %20 : vector<128x256xf32>
    %c0_17 = arith.constant 0 : index
    %c0_18 = arith.constant 0 : index
    %22 = vector.load %arg8[%c0_17, %c0_18] : memref<1x256xf32, #tpu.memory_space<vmem>>, vector<1x256xf32>
    %23 = vector.broadcast %22 : vector<1x256xf32> to vector<128x256xf32>
    %24 = arith.mulf %21, %23 : vector<128x256xf32>
    %25 = vector.extract_strided_slice %24 {offsets = [0, 0], sizes = [128, 128], strides = [1, 1]} : vector<128x256xf32> to vector<128x128xf32>
    %26 = vector.extract_strided_slice %24 {offsets = [0, 128], sizes = [128, 128], strides = [1, 1]} : vector<128x256xf32> to vector<128x128xf32>
    %27 = arith.addf %25, %26 : vector<128x128xf32>
    %cst_19 = arith.constant dense<0.000000e+00> : vector<128xf32>
    %28 = vector.multi_reduction <add>, %27, %cst_19 [1] : vector<128x128xf32> to vector<128xf32>
    %29 = vector.shape_cast %28 : vector<128xf32> to vector<128x1xf32>
    %c0_20 = arith.constant 0 : index
    %c0_21 = arith.constant 0 : index
    %30 = memref.load %arg9[%c0_20, %c0_21] : memref<1x1xf32, #tpu.memory_space<smem>>
    %31 = vector.broadcast %30 : f32 to vector<128x1xf32>
    %32 = arith.addf %29, %31 : vector<128x1xf32>
    %33 = tpu.iota {dimensions = array<i32: 0>} : vector<128x128xi32>
    %34 = tpu.iota {dimensions = array<i32: 1>} : vector<128x128xi32>
    %35 = arith.cmpi eq, %33, %34 : vector<128x128xi32>
    %36 = arith.extui %35 : vector<128x128xi1> to vector<128x128xi32>
    %37 = arith.sitofp %36 : vector<128x128xi32> to vector<128x128xf32>
    %38 = vector.broadcast %32 : vector<128x1xf32> to vector<128x128xf32>
    %39 = arith.mulf %38, %37 : vector<128x128xf32>
    %cst_22 = arith.constant dense<0.000000e+00> : vector<128xf32>
    %40 = vector.multi_reduction <add>, %39, %cst_22 [0] : vector<128x128xf32> to vector<128xf32>
    %c0_23 = arith.constant 0 : index
    %c0_24 = arith.constant 0 : index
    %41 = vector.load %arg10[%c0_23, %c0_24] : memref<1x128xf32, #tpu.memory_space<vmem>>, vector<1x128xf32>
    %42 = vector.shape_cast %41 : vector<1x128xf32> to vector<128xf32>
    %43 = vector.shape_cast %40 : vector<128xf32> to vector<1x128xf32>
    tpu.vector_store %arg10[%c0_23, %c0_24], %43 {strides = array<i32>} : memref<1x128xf32, #tpu.memory_space<vmem>>, vector<1x128xf32>,
    return
  }
  func.func @transform_0(%arg0: i32) -> (i32, i32) {
    %c0_i32 = arith.constant 0 : i32
    %c0_i32_0 = arith.constant 0 : i32
    return %arg0, %c0_i32 : i32, i32
  }
  func.func @transform_1(%arg0: i32) -> (i32, i32) {
    %c0_i32 = arith.constant 0 : i32
    %c0_i32_0 = arith.constant 0 : i32
    return %arg0, %c0_i32 : i32, i32
  }
  func.func @transform_2(%arg0: i32) -> (i32, i32) {
    %c0_i32 = arith.constant 0 : i32
    %c0_i32_0 = arith.constant 0 : i32
    %c0_i32_1 = arith.constant 0 : i32
    return %c0_i32, %c0_i32_0 : i32, i32
  }
  func.func @transform_3(%arg0: i32) -> (i32, i32) {
    %c0_i32 = arith.constant 0 : i32
    %c0_i32_0 = arith.constant 0 : i32
    %c0_i32_1 = arith.constant 0 : i32
    return %c0_i32, %c0_i32_0 : i32, i32
  }
  func.func @transform_4(%arg0: i32) -> (i32, i32) {
    %c0_i32 = arith.constant 0 : i32
    %c0_i32_0 = arith.constant 0 : i32
    %c0_i32_1 = arith.constant 0 : i32
    return %c0_i32, %c0_i32_0 : i32, i32
  }
  func.func @transform_5(%arg0: i32) -> (i32, i32) {
    %c0_i32 = arith.constant 0 : i32
    %c0_i32_0 = arith.constant 0 : i32
    %c0_i32_1 = arith.constant 0 : i32
    return %c0_i32, %c0_i32_0 : i32, i32
  }
  func.func @transform_6(%arg0: i32) -> (i32, i32) {
    %c0_i32 = arith.constant 0 : i32
    %c0_i32_0 = arith.constant 0 : i32
    %c0_i32_1 = arith.constant 0 : i32
    return %c0_i32, %c0_i32_0 : i32, i32
  }
  func.func @transform_7(%arg0: i32) -> (i32, i32) {
    %c0_i32 = arith.constant 0 : i32
    %c0_i32_0 = arith.constant 0 : i32
    %c0_i32_1 = arith.constant 0 : i32
    return %c0_i32, %c0_i32_0 : i32, i32
  }
  func.func @transform_8(%arg0: i32) -> (i32, i32) {
    %c0_i32 = arith.constant 0 : i32
    %c0_i32_0 = arith.constant 0 : i32
    %c0_i32_1 = arith.constant 0 : i32
    return %c0_i32, %c0_i32_0 : i32, i32
  }
  func.func @transform_9(%arg0: i32) -> (i32, i32) {
    %c0_i32 = arith.constant 0 : i32
    %c0_i32_0 = arith.constant 0 : i32
    return %arg0, %c0_i32 : i32, i32
  }
}

</mosaic_0001>

<llo_original>
// kernel: tpu_custom_call.1
$region0: #{tpu_custom_call.1}
  #allocation0 [shape = 'u32[]', space=smem, size = 0x4, offset = 0x4, fixed_abs, tag = 'smem constant byte address 0x4 - core index']
  #allocation1 [shape = 'u32[72,128]{1,0:T(1,128)}', space=vmem, size = 0x9000, scoped, tag = 'internal scratch']
  #allocation2 [shape = 'f32[1,1]{1,0:T(1,128)S(6)}', space=smem, size = 0x200, scoped, tag = 'scoped memory for tpu_custom_call.1']
  %s0 = inlined_call_operand.hbm [shape: f32[8,16], index: 0, kind: input, shape index: {}]
  %s1 = inlined_call_operand.hbm [shape: f32[8,8], index: 1, kind: input, shape index: {}]
  %s2 = inlined_call_operand.hbm [shape: bf16[16,256], index: 2, kind: input, shape index: {}]
  %s3 = inlined_call_operand.hbm [shape: bf16[8,256], index: 3, kind: input, shape index: {}]
  %s4 = inlined_call_operand.vmem [shape: f32[1,256], index: 4, kind: input, shape index: {}]
  %s5 = inlined_call_operand.hbm [shape: bf16[256,256], index: 5, kind: input, shape index: {}]
  %s6 = inlined_call_operand.vmem [shape: f32[1,256], index: 6, kind: input, shape index: {}]
  %s7 = inlined_call_operand.vmem [shape: f32[1,256], index: 7, kind: input, shape index: {}]
  %s8 = inlined_call_operand.<no memory space> [shape: f32[1,1], index: 8, kind: input, shape index: {}]
  %s9 = inlined_call_operand.hbm [shape: f32[1,128], index: 9, kind: output, shape index: {}]
  %s10 = sld [smem:[#allocation0]]
  $region66: #{tpu_custom_call.1} parent=0
    _
  %s12 = ssub.s32 1, %s10
  %s13 = scalar_select 0, %s12, %s10
  %14 = sst [smem:[#allocation2]] %s8
  $region1: #{tpu_custom_call.1} parent=0
    #allocation3 [shape = 'u8[65536]{0}', space=vmem, size = 0x10000, scoped, tag = 'input window, operand 0, single buffered']
    #allocation4 [shape = 's32[1]{0}', space=sflag, size = 0x4, scoped, tag = 'scoped memory for tpu_custom_call.1']
    #allocation5 [shape = 's32[1]{0}', space=sflag, size = 0x4, scoped, tag = 'scoped memory for tpu_custom_call.1']
    #allocation6 [shape = 'u8[65536]{0}', space=vmem, size = 0x10000, scoped, tag = 'input window, operand 1, single buffered']
    #allocation7 [shape = 's32[1]{0}', space=sflag, size = 0x4, scoped, tag = 'scoped memory for tpu_custom_call.1']
    #allocation8 [shape = 'u8[8192]{0}', space=vmem, size = 0x2000, scoped, tag = 'input window, operand 2, single buffered']
    #allocation9 [shape = 'u8[4096]{0}', space=vmem, size = 0x1000, scoped, tag = 'input window, operand 3, single buffered']
    #allocation10 [shape = 's32[1]{0}', space=sflag, size = 0x4, scoped, tag = 'scoped memory for tpu_custom_call.1']
    #allocation11 [shape = 'u8[131072]{0}', space=vmem, size = 0x20000, scoped, tag = 'input window, operand 5, single buffered']
    #allocation12 [shape = 'u8[512]{0}', space=vmem, size = 0x400, scoped, tag = 'output window, operand 0, single buffered']
    %15 = vsyncpa [#allocation4], 0
    %16 = vsyncpa [#allocation7], 0
    %17 = vsyncpa [#allocation10], 0
    %18 = vsyncpa [#allocation5], 0
    // Predicated region
    $region2: #{tpu_custom_call.1} parent=1 // pred_check
      _
    $region3: #{tpu_custom_call.1} parent=1 // pred_check_branch
      %20 = sbr.rel (0) target = $region5
    $region4: #{tpu_custom_call.1} parent=1 // pred_region
      %22 = vsyncadd [#allocation4], 1920
      %s23 = sshll.u32 %s0, 4
      %s24 = int_to_ptr.hbm [resolvable:$true] %s23
      %s25 = sshll.u32 [#allocation3], 4
      %s26 = int_to_ptr.vmem [resolvable:$true] %s25
      %31 = dma.hbm_to_vmem [thread:$0]  %s24, 128, %s26, [#allocation4], 128, 128, 8
    $region5: #{tpu_custom_call.1} parent=1 // pred_fallthru
      _
    // Predicated region
    $region6: #{tpu_custom_call.1} parent=1 // pred_check
      _
    $region7: #{tpu_custom_call.1} parent=1 // pred_check_branch
      %33 = sbr.rel (0) target = $region9
    $region8: #{tpu_custom_call.1} parent=1 // pred_region
      %35 = vsyncadd [#allocation7], 1920
      %s36 = sshll.u32 %s1, 4
      %s37 = int_to_ptr.hbm [resolvable:$true] %s36
      %s38 = sshll.u32 [#allocation6], 4
      %s39 = int_to_ptr.vmem [resolvable:$true] %s38
      %44 = dma.hbm_to_vmem [thread:$0]  %s37, 128, %s39, [#allocation7], 128, 128, 8
    $region9: #{tpu_custom_call.1} parent=1 // pred_fallthru
      _
    // Predicated region
    $region10: #{tpu_custom_call.1} parent=1 // pred_check
      _
    $region11: #{tpu_custom_call.1} parent=1 // pred_check_branch
      %46 = sbr.rel (0) target = $region13
    $region12: #{tpu_custom_call.1} parent=1 // pred_region
      %48 = vsyncadd [#allocation7], 0
      %s49 = sshll.u32 %s2, 4
      %s50 = int_to_ptr.hbm [resolvable:$true] %s49
      %s51 = sshll.u32 [#allocation8], 4
      %s52 = int_to_ptr.vmem [resolvable:$true] %s51
      %57 = dma.hbm_to_vmem [thread:$0]  %s50, 256, %s52, [#allocation7], 128, 128, 8
    $region13: #{tpu_custom_call.1} parent=1 // pred_fallthru
      _
    // Predicated region
    $region14: #{tpu_custom_call.1} parent=1 // pred_check
      _
    $region15: #{tpu_custom_call.1} parent=1 // pred_check_branch
      %59 = sbr.rel (0) target = $region17
    $region16: #{tpu_custom_call.1} parent=1 // pred_region
      %61 = vsyncadd [#allocation10], 0
      %s63 = sshll.u32 %s3, 4
      %s64 = int_to_ptr.hbm [resolvable:$true] %s63
      %s65 = sshll.u32 [#allocation9], 4
      %s66 = int_to_ptr.vmem [resolvable:$true] %s65
      %68 = dma.hbm_to_vmem [thread:$0]  %s64, 128, %s66, [#allocation10]
    $region17: #{tpu_custom_call.1} parent=1 // pred_fallthru
      _
    // Predicated region
    $region18: #{tpu_custom_call.1} parent=1 // pred_check
      _
    $region19: #{tpu_custom_call.1} parent=1 // pred_check_branch
      %70 = sbr.rel (0) target = $region21
    $region20: #{tpu_custom_call.1} parent=1 // pred_region
      _
    $region21: #{tpu_custom_call.1} parent=1 // pred_fallthru
      _
    // Predicated region
    $region22: #{tpu_custom_call.1} parent=1 // pred_check
      _
    $region23: #{tpu_custom_call.1} parent=1 // pred_check_branch
      %72 = sbr.rel (0) target = $region25
    $region24: #{tpu_custom_call.1} parent=1 // pred_region
      %74 = vsyncadd [#allocation10], 0
      %s75 = sshll.u32 %s5, 4
      %s76 = int_to_ptr.hbm [resolvable:$true] %s75
      %s77 = sshll.u32 [#allocation11], 4
      %s78 = int_to_ptr.vmem [resolvable:$true] %s77
      %83 = dma.hbm_to_vmem [thread:$0]  %s76, 4096, %s78, [#allocation10], 128, 128, 8
    $region25: #{tpu_custom_call.1} parent=1 // pred_fallthru
      _
    // Predicated region
    $region26: #{tpu_custom_call.1} parent=1 // pred_check
      _
    $region27: #{tpu_custom_call.1} parent=1 // pred_check_branch
      %85 = sbr.rel (0) target = $region29
    $region28: #{tpu_custom_call.1} parent=1 // pred_region
      _
    $region29: #{tpu_custom_call.1} parent=1 // pred_fallthru
      _
    // Predicated region
    $region30: #{tpu_custom_call.1} parent=1 // pred_check
      _
    $region31: #{tpu_custom_call.1} parent=1 // pred_check_branch
      %87 = sbr.rel (0) target = $region33
    $region32: #{tpu_custom_call.1} parent=1 // pred_region
      _
    $region33: #{tpu_custom_call.1} parent=1 // pred_fallthru
      _
    // Predicated region
    $region34: #{tpu_custom_call.1} parent=1 // pred_check
      _
    $region35: #{tpu_custom_call.1} parent=1 // pred_check_branch
      %89 = sbr.rel (0) target = $region37
    $region36: #{tpu_custom_call.1} parent=1 // pred_region
      _
    $region37: #{tpu_custom_call.1} parent=1 // pred_fallthru
      _
    // Predicated region
    $region38: #{tpu_custom_call.1} parent=1 // pred_check
      _
    $region39: #{tpu_custom_call.1} parent=1 // pred_check_branch
      %91 = sbr.rel (0) target = $region41
    $region40: #{tpu_custom_call.1} parent=1 // pred_region
      %93 = dma.done [#allocation4], 2048
    $region41: #{tpu_custom_call.1} parent=1 // pred_fallthru
      _
    // Predicated region
    $region42: #{tpu_custom_call.1} parent=1 // pred_check
      _
    $region43: #{tpu_custom_call.1} parent=1 // pred_check_branch
      %95 = sbr.rel (0) target = $region45
    $region44: #{tpu_custom_call.1} parent=1 // pred_region
      %97 = dma.done [#allocation7], 2048
    $region45: #{tpu_custom_call.1} parent=1 // pred_fallthru
      _
    // Predicated region
    $region46: #{tpu_custom_call.1} parent=1 // pred_check
      _
    $region47: #{tpu_custom_call.1} parent=1 // pred_check_branch
      %99 = sbr.rel (0) target = $region49
    $region48: #{tpu_custom_call.1} parent=1 // pred_region
      %101 = dma.done [#allocation7], 256
    $region49: #{tpu_custom_call.1} parent=1 // pred_fallthru
      _
    // Predicated region
    $region50: #{tpu_custom_call.1} parent=1 // pred_check
      _
    $region51: #{tpu_custom_call.1} parent=1 // pred_check_branch
      %103 = sbr.rel (0) target = $region53
    $region52: #{tpu_custom_call.1} parent=1 // pred_region
      %105 = dma.done [#allocation10], 128
    $region53: #{tpu_custom_call.1} parent=1 // pred_fallthru
      _
    // Predicated region
    $region54: #{tpu_custom_call.1} parent=1 // pred_check
      _
    $region55: #{tpu_custom_call.1} parent=1 // pred_check_branch
      %107 = sbr.rel (0) target = $region57
    $region56: #{tpu_custom_call.1} parent=1 // pred_region
      %109 = dma.done [#allocation10], 4096
    $region57: #{tpu_custom_call.1} parent=1 // pred_fallthru
      _
    %v111 = vld [vmem:[#allocation3] sm:$0xff]
    %v112 = vld [vmem:[#allocation3 + $0x8] sm:$0xff]
    %v113 = vld [vmem:[#allocation3 + $0x10] sm:$0xff]
    %v114 = vld [vmem:[#allocation3 + $0x18] sm:$0xff]
    %v115 = vld [vmem:[#allocation3 + $0x20] sm:$0xff]
    %v116 = vld [vmem:[#allocation3 + $0x28] sm:$0xff]
    %v117 = vld [vmem:[#allocation3 + $0x30] sm:$0xff]
    %v118 = vld [vmem:[#allocation3 + $0x38] sm:$0xff]
    %v119 = vld [vmem:[#allocation3 + $0x40] sm:$0xff]
    %v120 = vld [vmem:[#allocation3 + $0x48] sm:$0xff]
    %v121 = vld [vmem:[#allocation3 + $0x50] sm:$0xff]
    %v122 = vld [vmem:[#allocation3 + $0x58] sm:$0xff]
    %v123 = vld [vmem:[#allocation3 + $0x60] sm:$0xff]
    %v124 = vld [vmem:[#allocation3 + $0x68] sm:$0xff]
    %v125 = vld [vmem:[#allocation3 + $0x70] sm:$0xff]
    %v126 = vld [vmem:[#allocation3 + $0x78] sm:$0xff]
    %v127 = vpack.c.bf16 %v112, %v111
    %v128 = vpack.c.bf16 %v114, %v113
    %v129 = vpack.c.bf16 %v116, %v115
    %v130 = vpack.c.bf16 %v118, %v117
    %v131 = vpack.c.bf16 %v120, %v119
    %v132 = vpack.c.bf16 %v122, %v121
    %v133 = vpack.c.bf16 %v124, %v123
    %v134 = vpack.c.bf16 %v126, %v125
    %v135 = vld [vmem:[#allocation6] sm:$0xff]
    %v136 = vld [vmem:[#allocation6 + $0x8] sm:$0xff]
    %v137 = vld [vmem:[#allocation6 + $0x10] sm:$0xff]
    %v138 = vld [vmem:[#allocation6 + $0x18] sm:$0xff]
    %v139 = vld [vmem:[#allocation6 + $0x20] sm:$0xff]
    %v140 = vld [vmem:[#allocation6 + $0x28] sm:$0xff]
    %v141 = vld [vmem:[#allocation6 + $0x30] sm:$0xff]
    %v142 = vld [vmem:[#allocation6 + $0x38] sm:$0xff]
    %v143 = vld [vmem:[#allocation6 + $0x40] sm:$0xff]
    %v144 = vld [vmem:[#allocation6 + $0x48] sm:$0xff]
    %v145 = vld [vmem:[#allocation6 + $0x50] sm:$0xff]
    %v146 = vld [vmem:[#allocation6 + $0x58] sm:$0xff]
    %v147 = vld [vmem:[#allocation6 + $0x60] sm:$0xff]
    %v148 = vld [vmem:[#allocation6 + $0x68] sm:$0xff]
    %v149 = vld [vmem:[#allocation6 + $0x70] sm:$0xff]
    %v150 = vld [vmem:[#allocation6 + $0x78] sm:$0xff]
    %v151 = vpack.c.bf16 %v136, %v135
    %v152 = vpack.c.bf16 %v138, %v137
    %v153 = vpack.c.bf16 %v140, %v139
    %v154 = vpack.c.bf16 %v142, %v141
    %v155 = vpack.c.bf16 %v144, %v143
    %v156 = vpack.c.bf16 %v146, %v145
    %v157 = vpack.c.bf16 %v148, %v147
    %v158 = vpack.c.bf16 %v150, %v149
    %v159 = vld [vmem:[#allocation8] sm:$0xff]
    %v160 = vld [vmem:[#allocation8 + $0x8] sm:$0xff]
    %v161 = vld [vmem:[#allocation9] sm:$0xff]
    %v163 = vunpack.c.l.b16 %v161
    %v164 = vunpack.c.h.b16 %v161
    %v165 = vpack.c.b16 %v163, %v163
    %v166 = vpack.c.b16 %v164, %v164
    %vm167 = vcmask 64512
    %v169 = vsel %vm167, %v151, 0
    %v172 = vsel %vm167, %v152, 0
    %v175 = vsel %vm167, %v153, 0
    %v178 = vsel %vm167, %v154, 0
    %v181 = vsel %vm167, %v155, 0
    %v184 = vsel %vm167, %v156, 0
    %v187 = vsel %vm167, %v157, 0
    %v190 = vsel %vm167, %v158, 0
    %vm192 = vcmask 1043456
    %v194 = vsel %vm192, %v165, 0
    %v197 = vsel %vm192, %v166, 0
    %199 = vmatpush.bf16.msra.mxu0 0
    %200 = vmatpush.bf16.msra.mxu0 0
    %201 = vmatpush.bf16.msra.mxu0 0
    %202 = vmatpush.bf16.msra.mxu0 0
    %203 = vmatpush.bf16.msra.mxu0 0
    %204 = vmatpush.bf16.msra.mxu0 0
    %205 = vmatpush.bf16.msra.mxu0 0
    %206 = vmatpush.bf16.msra.mxu0 %v194
    %207 = vmatmul.bf16.gmra.mxu0 %v169
    %v208 = vpop.f32.mrf.mxu0
    %v209 = vadd.f32 0.0, %v208
    %v210 = vpop.f32.mrf.mxu0
    %v211 = vadd.f32 0.0, %v210
    %212 = vmatmul.bf16.gmra.mxu0 %v172
    %v213 = vpop.f32.mrf.mxu0
    %v214 = vadd.f32 0.0, %v213
    %v215 = vpop.f32.mrf.mxu0
    %v216 = vadd.f32 0.0, %v215
    %217 = vmatmul.bf16.gmra.mxu0 %v175
    %v218 = vpop.f32.mrf.mxu0
    %v219 = vadd.f32 0.0, %v218
    %v220 = vpop.f32.mrf.mxu0
    %v221 = vadd.f32 0.0, %v220
    %222 = vmatmul.bf16.gmra.mxu0 %v178
    %v223 = vpop.f32.mrf.mxu0
    %v224 = vadd.f32 0.0, %v223
    %v225 = vpop.f32.mrf.mxu0
    %v226 = vadd.f32 0.0, %v225
    %227 = vmatmul.bf16.gmra.mxu0 %v181
    %v228 = vpop.f32.mrf.mxu0
    %v229 = vadd.f32 0.0, %v228
    %v230 = vpop.f32.mrf.mxu0
    %v231 = vadd.f32 0.0, %v230
    %232 = vmatmul.bf16.gmra.mxu0 %v184
    %v233 = vpop.f32.mrf.mxu0
    %v234 = vadd.f32 0.0, %v233
    %v235 = vpop.f32.mrf.mxu0
    %v236 = vadd.f32 0.0, %v235
    %237 = vmatmul.bf16.gmra.mxu0 %v187
    %v238 = vpop.f32.mrf.mxu0
    %v239 = vadd.f32 0.0, %v238
    %v240 = vpop.f32.mrf.mxu0
    %v241 = vadd.f32 0.0, %v240
    %242 = vmatmul.bf16.gmra.mxu0 %v190
    %v243 = vpop.f32.mrf.mxu0
    %v244 = vadd.f32 0.0, %v243
    %v245 = vpop.f32.mrf.mxu0
    %v246 = vadd.f32 0.0, %v245
    %247 = vdwg.mxu0
    %248 = vmatpush.bf16.msra.mxu0 0
    %249 = vmatpush.bf16.msra.mxu0 0
    %250 = vmatpush.bf16.msra.mxu0 0
    %251 = vmatpush.bf16.msra.mxu0 0
    %252 = vmatpush.bf16.msra.mxu0 0
    %253 = vmatpush.bf16.msra.mxu0 0
    %254 = vmatpush.bf16.msra.mxu0 0
    %255 = vmatpush.bf16.msra.mxu0 %v197
    %256 = vmatmul.bf16.gmra.mxu0 %v169
    %v257 = vpop.f32.mrf.mxu0
    %v258 = vadd.f32 0.0, %v257
    %v259 = vpop.f32.mrf.mxu0
    %v260 = vadd.f32 0.0, %v259
    %261 = vmatmul.bf16.gmra.mxu0 %v172
    %v262 = vpop.f32.mrf.mxu0
    %v263 = vadd.f32 0.0, %v262
    %v264 = vpop.f32.mrf.mxu0
    %v265 = vadd.f32 0.0, %v264
    %266 = vmatmul.bf16.gmra.mxu0 %v175
    %v267 = vpop.f32.mrf.mxu0
    %v268 = vadd.f32 0.0, %v267
    %v269 = vpop.f32.mrf.mxu0
    %v270 = vadd.f32 0.0, %v269
    %271 = vmatmul.bf16.gmra.mxu0 %v178
    %v272 = vpop.f32.mrf.mxu0
    %v273 = vadd.f32 0.0, %v272
    %v274 = vpop.f32.mrf.mxu0
    %v275 = vadd.f32 0.0, %v274
    %276 = vmatmul.bf16.gmra.mxu0 %v181
    %v277 = vpop.f32.mrf.mxu0
    %v278 = vadd.f32 0.0, %v277
    %v279 = vpop.f32.mrf.mxu0
    %v280 = vadd.f32 0.0, %v279
    %281 = vmatmul.bf16.gmra.mxu0 %v184
    %v282 = vpop.f32.mrf.mxu0
    %v283 = vadd.f32 0.0, %v282
    %v284 = vpop.f32.mrf.mxu0
    %v285 = vadd.f32 0.0, %v284
    %286 = vmatmul.bf16.gmra.mxu0 %v187
    %v287 = vpop.f32.mrf.mxu0
    %v288 = vadd.f32 0.0, %v287
    %v289 = vpop.f32.mrf.mxu0
    %v290 = vadd.f32 0.0, %v289
    %291 = vmatmul.bf16.gmra.mxu0 %v190
    %v292 = vpop.f32.mrf.mxu0
    %v293 = vadd.f32 0.0, %v292
    %v294 = vpop.f32.mrf.mxu0
    %v295 = vadd.f32 0.0, %v294
    %296 = vdwg.mxu0
    %v299 = vunpack.c.l.b16 %v159
    %v300 = vunpack.c.h.b16 %v159
    %v301 = vunpack.c.l.b16 %v160
    %v302 = vunpack.c.h.b16 %v160
    %v303 = vpack.c.b16 %v301, %v299
    %v304 = vpack.c.b16 %v302, %v300
    %vm307 = vcmask 130048
    %v309 = vsel %vm307, %v127, 0
    %v312 = vsel %vm307, %v128, 0
    %v315 = vsel %vm307, %v129, 0
    %v318 = vsel %vm307, %v130, 0
    %v321 = vsel %vm307, %v131, 0
    %v324 = vsel %vm307, %v132, 0
    %v327 = vsel %vm307, %v133, 0
    %v330 = vsel %vm307, %v134, 0
    %332 = vmatpush.bf16.msra.mxu0 0
    %333 = vmatpush.bf16.msra.mxu0 0
    %334 = vmatpush.bf16.msra.mxu0 0
    %335 = vmatpush.bf16.msra.mxu0 0
    %336 = vmatpush.bf16.msra.mxu0 0
    %337 = vmatpush.bf16.msra.mxu0 0
    %338 = vmatpush.bf16.msra.mxu0 0
    %339 = vmatpush.bf16.msra.mxu0 %v303
    %340 = vmatmul.bf16.gmra.mxu0 %v309
    %v341 = vpop.f32.mrf.mxu0
    %v342 = vadd.f32 %v209, %v341
    %v343 = vpop.f32.mrf.mxu0
    %v344 = vadd.f32 %v211, %v343
    %345 = vmatmul.bf16.gmra.mxu0 %v312
    %v346 = vpop.f32.mrf.mxu0
    %v347 = vadd.f32 %v214, %v346
    %v348 = vpop.f32.mrf.mxu0
    %v349 = vadd.f32 %v216, %v348
    %350 = vmatmul.bf16.gmra.mxu0 %v315
    %v351 = vpop.f32.mrf.mxu0
    %v352 = vadd.f32 %v219, %v351
    %v353 = vpop.f32.mrf.mxu0
    %v354 = vadd.f32 %v221, %v353
    %355 = vmatmul.bf16.gmra.mxu0 %v318
    %v356 = vpop.f32.mrf.mxu0
    %v357 = vadd.f32 %v224, %v356
    %v358 = vpop.f32.mrf.mxu0
    %v359 = vadd.f32 %v226, %v358
    %360 = vmatmul.bf16.gmra.mxu0 %v321
    %v361 = vpop.f32.mrf.mxu0
    %v362 = vadd.f32 %v229, %v361
    %v363 = vpop.f32.mrf.mxu0
    %v364 = vadd.f32 %v231, %v363
    %365 = vmatmul.bf16.gmra.mxu0 %v324
    %v366 = vpop.f32.mrf.mxu0
    %v367 = vadd.f32 %v234, %v366
    %v368 = vpop.f32.mrf.mxu0
    %v369 = vadd.f32 %v236, %v368
    %370 = vmatmul.bf16.gmra.mxu0 %v327
    %v371 = vpop.f32.mrf.mxu0
    %v372 = vadd.f32 %v239, %v371
    %v373 = vpop.f32.mrf.mxu0
    %v374 = vadd.f32 %v241, %v373
    %375 = vmatmul.bf16.gmra.mxu0 %v330
    %v376 = vpop.f32.mrf.mxu0
    %v377 = vadd.f32 %v244, %v376
    %v378 = vpop.f32.mrf.mxu0
    %v379 = vadd.f32 %v246, %v378
    %380 = vdwg.mxu0
    %381 = vmatpush.bf16.msra.mxu0 0
    %382 = vmatpush.bf16.msra.mxu0 0
    %383 = vmatpush.bf16.msra.mxu0 0
    %384 = vmatpush.bf16.msra.mxu0 0
    %385 = vmatpush.bf16.msra.mxu0 0
    %386 = vmatpush.bf16.msra.mxu0 0
    %387 = vmatpush.bf16.msra.mxu0 0
    %388 = vmatpush.bf16.msra.mxu0 %v304
    %389 = vmatmul.bf16.gmra.mxu0 %v309
    %v390 = vpop.f32.mrf.mxu0
    %v391 = vadd.f32 %v258, %v390
    %v392 = vpop.f32.mrf.mxu0
    %v393 = vadd.f32 %v260, %v392
    %394 = vmatmul.bf16.gmra.mxu0 %v312
    %v395 = vpop.f32.mrf.mxu0
    %v396 = vadd.f32 %v263, %v395
    %v397 = vpop.f32.mrf.mxu0
    %v398 = vadd.f32 %v265, %v397
    %399 = vmatmul.bf16.gmra.mxu0 %v315
    %v400 = vpop.f32.mrf.mxu0
    %v401 = vadd.f32 %v268, %v400
    %v402 = vpop.f32.mrf.mxu0
    %v403 = vadd.f32 %v270, %v402
    %404 = vmatmul.bf16.gmra.mxu0 %v318
    %v405 = vpop.f32.mrf.mxu0
    %v406 = vadd.f32 %v273, %v405
    %v407 = vpop.f32.mrf.mxu0
    %v408 = vadd.f32 %v275, %v407
    %409 = vmatmul.bf16.gmra.mxu0 %v321
    %v410 = vpop.f32.mrf.mxu0
    %v411 = vadd.f32 %v278, %v410
    %v412 = vpop.f32.mrf.mxu0
    %v413 = vadd.f32 %v280, %v412
    %414 = vmatmul.bf16.gmra.mxu0 %v324
    %v415 = vpop.f32.mrf.mxu0
    %v416 = vadd.f32 %v283, %v415
    %v417 = vpop.f32.mrf.mxu0
    %v418 = vadd.f32 %v285, %v417
    %419 = vmatmul.bf16.gmra.mxu0 %v327
    %v420 = vpop.f32.mrf.mxu0
    %v421 = vadd.f32 %v288, %v420
    %v422 = vpop.f32.mrf.mxu0
    %v423 = vadd.f32 %v290, %v422
    %424 = vmatmul.bf16.gmra.mxu0 %v330
    %v425 = vpop.f32.mrf.mxu0
    %v426 = vadd.f32 %v293, %v425
    %v427 = vpop.f32.mrf.mxu0
    %v428 = vadd.f32 %v295, %v427
    %429 = vdwg.mxu0
    %v430 = vld [vmem:[%s4] sm:$0x3]
    %v432 = vperm.slane %v430, 0
    %v433 = vperm.slane %v430, 1
    %v436 = vadd.f32 %v342, %v432
    %v437 = vadd.f32 %v391, %v433
    %v438 = vadd.f32 %v344, %v432
    %v439 = vadd.f32 %v393, %v433
    %v440 = vadd.f32 %v347, %v432
    %v441 = vadd.f32 %v396, %v433
    %v442 = vadd.f32 %v349, %v432
    %v443 = vadd.f32 %v398, %v433
    %v444 = vadd.f32 %v352, %v432
    %v445 = vadd.f32 %v401, %v433
    %v446 = vadd.f32 %v354, %v432
    %v447 = vadd.f32 %v403, %v433
    %v448 = vadd.f32 %v357, %v432
    %v449 = vadd.f32 %v406, %v433
    %v450 = vadd.f32 %v359, %v432
    %v451 = vadd.f32 %v408, %v433
    %v452 = vadd.f32 %v362, %v432
    %v453 = vadd.f32 %v411, %v433
    %v454 = vadd.f32 %v364, %v432
    %v455 = vadd.f32 %v413, %v433
    %v456 = vadd.f32 %v367, %v432
    %v457 = vadd.f32 %v416, %v433
    %v458 = vadd.f32 %v369, %v432
    %v459 = vadd.f32 %v418, %v433
    %v460 = vadd.f32 %v372, %v432
    %v461 = vadd.f32 %v421, %v433
    %v462 = vadd.f32 %v374, %v432
    %v463 = vadd.f32 %v423, %v433
    %v464 = vadd.f32 %v377, %v432
    %v465 = vadd.f32 %v426, %v433
    %v466 = vadd.f32 %v379, %v432
    %v467 = vadd.f32 %v428, %v433
    %v468 = vmax.f32 %v436, 0.0
    %v469 = vmax.f32 %v437, 0.0
    %v470 = vmax.f32 %v438, 0.0
    %v471 = vmax.f32 %v439, 0.0
    %v472 = vmax.f32 %v440, 0.0
    %v473 = vmax.f32 %v441, 0.0
    %v474 = vmax.f32 %v442, 0.0
    %v475 = vmax.f32 %v443, 0.0
    %v476 = vmax.f32 %v444, 0.0
    %v477 = vmax.f32 %v445, 0.0
    %v478 = vmax.f32 %v446, 0.0
    %v479 = vmax.f32 %v447, 0.0
    %v480 = vmax.f32 %v448, 0.0
    %v481 = vmax.f32 %v449, 0.0
    %v482 = vmax.f32 %v450, 0.0
    %v483 = vmax.f32 %v451, 0.0
    %v484 = vmax.f32 %v452, 0.0
    %v485 = vmax.f32 %v453, 0.0
    %v486 = vmax.f32 %v454, 0.0
    %v487 = vmax.f32 %v455, 0.0
    %v488 = vmax.f32 %v456, 0.0
    %v489 = vmax.f32 %v457, 0.0
    %v490 = vmax.f32 %v458, 0.0
    %v491 = vmax.f32 %v459, 0.0
    %v492 = vmax.f32 %v460, 0.0
    %v493 = vmax.f32 %v461, 0.0
    %v494 = vmax.f32 %v462, 0.0
    %v495 = vmax.f32 %v463, 0.0
    %v496 = vmax.f32 %v464, 0.0
    %v497 = vmax.f32 %v465, 0.0
    %v498 = vmax.f32 %v466, 0.0
    %v499 = vmax.f32 %v467, 0.0
    %v500 = vpack.c.bf16 %v470, %v468
    %v501 = vpack.c.bf16 %v471, %v469
    %v502 = vpack.c.bf16 %v474, %v472
    %v503 = vpack.c.bf16 %v475, %v473
    %v504 = vpack.c.bf16 %v478, %v476
    %v505 = vpack.c.bf16 %v479, %v477
    %v506 = vpack.c.bf16 %v482, %v480
    %v507 = vpack.c.bf16 %v483, %v481
    %v508 = vpack.c.bf16 %v486, %v484
    %v509 = vpack.c.bf16 %v487, %v485
    %v510 = vpack.c.bf16 %v490, %v488
    %v511 = vpack.c.bf16 %v491, %v489
    %v512 = vpack.c.bf16 %v494, %v492
    %v513 = vpack.c.bf16 %v495, %v493
    %v514 = vpack.c.bf16 %v498, %v496
    %v515 = vpack.c.bf16 %v499, %v497
    %v516 = vld [vmem:[#allocation11] sm:$0xff]
    %v517 = vld [vmem:[#allocation11 + $0x8] sm:$0xff]
    %v518 = vld [vmem:[#allocation11 + $0x10] sm:$0xff]
    %v519 = vld [vmem:[#allocation11 + $0x18] sm:$0xff]
    %v520 = vld [vmem:[#allocation11 + $0x20] sm:$0xff]
    %v521 = vld [vmem:[#allocation11 + $0x28] sm:$0xff]
    %v522 = vld [vmem:[#allocation11 + $0x30] sm:$0xff]
    %v523 = vld [vmem:[#allocation11 + $0x38] sm:$0xff]
    %v524 = vld [vmem:[#allocation11 + $0x40] sm:$0xff]
    %v525 = vld [vmem:[#allocation11 + $0x48] sm:$0xff]
    %v526 = vld [vmem:[#allocation11 + $0x50] sm:$0xff]
    %v527 = vld [vmem:[#allocation11 + $0x58] sm:$0xff]
    %v528 = vld [vmem:[#allocation11 + $0x60] sm:$0xff]
    %v529 = vld [vmem:[#allocation11 + $0x68] sm:$0xff]
    %v530 = vld [vmem:[#allocation11 + $0x70] sm:$0xff]
    %v531 = vld [vmem:[#allocation11 + $0x78] sm:$0xff]
    %v532 = vld [vmem:[#allocation11 + $0x80] sm:$0xff]
    %v533 = vld [vmem:[#allocation11 + $0x88] sm:$0xff]
    %v534 = vld [vmem:[#allocation11 + $0x90] sm:$0xff]
    %v535 = vld [vmem:[#allocation11 + $0x98] sm:$0xff]
    %v536 = vld [vmem:[#allocation11 + $0xa0] sm:$0xff]
    %v537 = vld [vmem:[#allocation11 + $0xa8] sm:$0xff]
    %v538 = vld [vmem:[#allocation11 + $0xb0] sm:$0xff]
    %v539 = vld [vmem:[#allocation11 + $0xb8] sm:$0xff]
    %v540 = vld [vmem:[#allocation11 + $0xc0] sm:$0xff]
    %v541 = vld [vmem:[#allocation11 + $0xc8] sm:$0xff]
    %v542 = vld [vmem:[#allocation11 + $0xd0] sm:$0xff]
    %v543 = vld [vmem:[#allocation11 + $0xd8] sm:$0xff]
    %v544 = vld [vmem:[#allocation11 + $0xe0] sm:$0xff]
    %v545 = vld [vmem:[#allocation11 + $0xe8] sm:$0xff]
    %v546 = vld [vmem:[#allocation11 + $0xf0] sm:$0xff]
    %v547 = vld [vmem:[#allocation11 + $0xf8] sm:$0xff]
    %v548 = vld [vmem:[%s6] sm:$0x3]
    %v550 = vperm.slane %v548, 0
    %v551 = vperm.slane %v548, 1
    %v586 = vunpack.c.l.b16 %v516
    %v587 = vunpack.c.h.b16 %v516
    %v588 = vunpack.c.l.b16 %v517
    %v589 = vunpack.c.h.b16 %v517
    %v590 = vunpack.c.l.b16 %v518
    %v591 = vunpack.c.h.b16 %v518
    %v592 = vunpack.c.l.b16 %v519
    %v593 = vunpack.c.h.b16 %v519
    %v594 = vunpack.c.l.b16 %v520
    %v595 = vunpack.c.h.b16 %v520
    %v596 = vunpack.c.l.b16 %v521
    %v597 = vunpack.c.h.b16 %v521
    %v598 = vunpack.c.l.b16 %v522
    %v599 = vunpack.c.h.b16 %v522
    %v600 = vunpack.c.l.b16 %v523
    %v601 = vunpack.c.h.b16 %v523
    %v602 = vunpack.c.l.b16 %v524
    %v603 = vunpack.c.h.b16 %v524
    %v604 = vunpack.c.l.b16 %v525
    %v605 = vunpack.c.h.b16 %v525
    %v606 = vunpack.c.l.b16 %v526
    %v607 = vunpack.c.h.b16 %v526
    %v608 = vunpack.c.l.b16 %v527
    %v609 = vunpack.c.h.b16 %v527
    %v610 = vunpack.c.l.b16 %v528
    %v611 = vunpack.c.h.b16 %v528
    %v612 = vunpack.c.l.b16 %v529
    %v613 = vunpack.c.h.b16 %v529
    %v614 = vunpack.c.l.b16 %v530
    %v615 = vunpack.c.h.b16 %v530
    %v616 = vunpack.c.l.b16 %v531
    %v617 = vunpack.c.h.b16 %v531
    %v618 = vunpack.c.l.b16 %v532
    %v619 = vunpack.c.h.b16 %v532
    %v620 = vunpack.c.l.b16 %v533
    %v621 = vunpack.c.h.b16 %v533
    %v622 = vunpack.c.l.b16 %v534
    %v623 = vunpack.c.h.b16 %v534
    %v624 = vunpack.c.l.b16 %v535
    %v625 = vunpack.c.h.b16 %v535
    %v626 = vunpack.c.l.b16 %v536
    %v627 = vunpack.c.h.b16 %v536
    %v628 = vunpack.c.l.b16 %v537
    %v629 = vunpack.c.h.b16 %v537
    %v630 = vunpack.c.l.b16 %v538
    %v631 = vunpack.c.h.b16 %v538
    %v632 = vunpack.c.l.b16 %v539
    %v633 = vunpack.c.h.b16 %v539
    %v634 = vunpack.c.l.b16 %v540
    %v635 = vunpack.c.h.b16 %v540
    %v636 = vunpack.c.l.b16 %v541
    %v637 = vunpack.c.h.b16 %v541
    %v638 = vunpack.c.l.b16 %v542
    %v639 = vunpack.c.h.b16 %v542
    %v640 = vunpack.c.l.b16 %v543
    %v641 = vunpack.c.h.b16 %v543
    %v642 = vunpack.c.l.b16 %v544
    %v643 = vunpack.c.h.b16 %v544
    %v644 = vunpack.c.l.b16 %v545
    %v645 = vunpack.c.h.b16 %v545
    %v646 = vunpack.c.l.b16 %v546
    %v647 = vunpack.c.h.b16 %v546
    %v648 = vunpack.c.l.b16 %v547
    %v649 = vunpack.c.h.b16 %v547
    %v650 = vpack.c.b16 %v588, %v586
    %v651 = vpack.c.b16 %v589, %v587
    %v652 = vpack.c.b16 %v592, %v590
    %v653 = vpack.c.b16 %v593, %v591
    %v654 = vpack.c.b16 %v596, %v594
    %v655 = vpack.c.b16 %v597, %v595
    %v656 = vpack.c.b16 %v600, %v598
    %v657 = vpack.c.b16 %v601, %v599
    %v658 = vpack.c.b16 %v604, %v602
    %v659 = vpack.c.b16 %v605, %v603
    %v660 = vpack.c.b16 %v608, %v606
    %v661 = vpack.c.b16 %v609, %v607
    %v662 = vpack.c.b16 %v612, %v610
    %v663 = vpack.c.b16 %v613, %v611
    %v664 = vpack.c.b16 %v616, %v614
    %v665 = vpack.c.b16 %v617, %v615
    %v666 = vpack.c.b16 %v620, %v618
    %v667 = vpack.c.b16 %v621, %v619
    %v668 = vpack.c.b16 %v624, %v622
    %v669 = vpack.c.b16 %v625, %v623
    %v670 = vpack.c.b16 %v628, %v626
    %v671 = vpack.c.b16 %v629, %v627
    %v672 = vpack.c.b16 %v632, %v630
    %v673 = vpack.c.b16 %v633, %v631
    %v674 = vpack.c.b16 %v636, %v634
    %v675 = vpack.c.b16 %v637, %v635
    %v676 = vpack.c.b16 %v640, %v638
    %v677 = vpack.c.b16 %v641, %v639
    %v678 = vpack.c.b16 %v644, %v642
    %v679 = vpack.c.b16 %v645, %v643
    %v680 = vpack.c.b16 %v648, %v646
    %v681 = vpack.c.b16 %v649, %v647
    %714 = vmatpush.bf16.msra.mxu0 %v664
    %715 = vmatpush.bf16.msra.mxu0 %v662
    %716 = vmatpush.bf16.msra.mxu0 %v660
    %717 = vmatpush.bf16.msra.mxu0 %v658
    %718 = vmatpush.bf16.msra.mxu0 %v656
    %719 = vmatpush.bf16.msra.mxu0 %v654
    %720 = vmatpush.bf16.msra.mxu0 %v652
    %721 = vmatpush.bf16.msra.mxu0 %v650
    %722 = vmatmul.bf16.gmra.mxu0 %v500
    %v723 = vpop.f32.mrf.mxu0
    %v724 = vadd.f32 %v550, %v723
    %v725 = vpop.f32.mrf.mxu0
    %v726 = vadd.f32 %v550, %v725
    %727 = vmatmul.bf16.gmra.mxu0 %v502
    %v728 = vpop.f32.mrf.mxu0
    %v729 = vadd.f32 %v550, %v728
    %v730 = vpop.f32.mrf.mxu0
    %v731 = vadd.f32 %v550, %v730
    %732 = vmatmul.bf16.gmra.mxu0 %v504
    %v733 = vpop.f32.mrf.mxu0
    %v734 = vadd.f32 %v550, %v733
    %v735 = vpop.f32.mrf.mxu0
    %v736 = vadd.f32 %v550, %v735
    %737 = vmatmul.bf16.gmra.mxu0 %v506
    %v738 = vpop.f32.mrf.mxu0
    %v739 = vadd.f32 %v550, %v738
    %v740 = vpop.f32.mrf.mxu0
    %v741 = vadd.f32 %v550, %v740
    %742 = vmatmul.bf16.gmra.mxu0 %v508
    %v743 = vpop.f32.mrf.mxu0
    %v744 = vadd.f32 %v550, %v743
    %v745 = vpop.f32.mrf.mxu0
    %v746 = vadd.f32 %v550, %v745
    %747 = vmatmul.bf16.gmra.mxu0 %v510
    %v748 = vpop.f32.mrf.mxu0
    %v749 = vadd.f32 %v550, %v748
    %v750 = vpop.f32.mrf.mxu0
    %v751 = vadd.f32 %v550, %v750
    %752 = vmatmul.bf16.gmra.mxu0 %v512
    %v753 = vpop.f32.mrf.mxu0
    %v754 = vadd.f32 %v550, %v753
    %v755 = vpop.f32.mrf.mxu0
    %v756 = vadd.f32 %v550, %v755
    %757 = vmatmul.bf16.gmra.mxu0 %v514
    %v758 = vpop.f32.mrf.mxu0
    %v759 = vadd.f32 %v550, %v758
    %v760 = vpop.f32.mrf.mxu0
    %v761 = vadd.f32 %v550, %v760
    %762 = vdwg.mxu0
    %763 = vmatpush.bf16.msra.mxu0 %v680
    %764 = vmatpush.bf16.msra.mxu0 %v678
    %765 = vmatpush.bf16.msra.mxu0 %v676
    %766 = vmatpush.bf16.msra.mxu0 %v674
    %767 = vmatpush.bf16.msra.mxu0 %v672
    %768 = vmatpush.bf16.msra.mxu0 %v670
    %769 = vmatpush.bf16.msra.mxu0 %v668
    %770 = vmatpush.bf16.msra.mxu0 %v666
    %771 = vmatmul.bf16.gmra.mxu0 %v501
    %v772 = vpop.f32.mrf.mxu0
    %v773 = vadd.f32 %v724, %v772
    %v774 = vpop.f32.mrf.mxu0
    %v775 = vadd.f32 %v726, %v774
    %776 = vmatmul.bf16.gmra.mxu0 %v503
    %v777 = vpop.f32.mrf.mxu0
    %v778 = vadd.f32 %v729, %v777
    %v779 = vpop.f32.mrf.mxu0
    %v780 = vadd.f32 %v731, %v779
    %781 = vmatmul.bf16.gmra.mxu0 %v505
    %v782 = vpop.f32.mrf.mxu0
    %v783 = vadd.f32 %v734, %v782
    %v784 = vpop.f32.mrf.mxu0
    %v785 = vadd.f32 %v736, %v784
    %786 = vmatmul.bf16.gmra.mxu0 %v507
    %v787 = vpop.f32.mrf.mxu0
    %v788 = vadd.f32 %v739, %v787
    %v789 = vpop.f32.mrf.mxu0
    %v790 = vadd.f32 %v741, %v789
    %791 = vmatmul.bf16.gmra.mxu0 %v509
    %v792 = vpop.f32.mrf.mxu0
    %v793 = vadd.f32 %v744, %v792
    %v794 = vpop.f32.mrf.mxu0
    %v795 = vadd.f32 %v746, %v794
    %796 = vmatmul.bf16.gmra.mxu0 %v511
    %v797 = vpop.f32.mrf.mxu0
    %v798 = vadd.f32 %v749, %v797
    %v799 = vpop.f32.mrf.mxu0
    %v800 = vadd.f32 %v751, %v799
    %801 = vmatmul.bf16.gmra.mxu0 %v513
    %v802 = vpop.f32.mrf.mxu0
    %v803 = vadd.f32 %v754, %v802
    %v804 = vpop.f32.mrf.mxu0
    %v805 = vadd.f32 %v756, %v804
    %806 = vmatmul.bf16.gmra.mxu0 %v515
    %v807 = vpop.f32.mrf.mxu0
    %v808 = vadd.f32 %v759, %v807
    %v809 = vpop.f32.mrf.mxu0
    %v810 = vadd.f32 %v761, %v809
    %811 = vdwg.mxu0
    %812 = vmatpush.bf16.msra.mxu0 %v665
    %813 = vmatpush.bf16.msra.mxu0 %v663
    %814 = vmatpush.bf16.msra.mxu0 %v661
    %815 = vmatpush.bf16.msra.mxu0 %v659
    %816 = vmatpush.bf16.msra.mxu0 %v657
    %817 = vmatpush.bf16.msra.mxu0 %v655
    %818 = vmatpush.bf16.msra.mxu0 %v653
    %819 = vmatpush.bf16.msra.mxu0 %v651
    %820 = vmatmul.bf16.gmra.mxu0 %v500
    %v821 = vpop.f32.mrf.mxu0
    %v822 = vadd.f32 %v551, %v821
    %v823 = vpop.f32.mrf.mxu0
    %v824 = vadd.f32 %v551, %v823
    %825 = vmatmul.bf16.gmra.mxu0 %v502
    %v826 = vpop.f32.mrf.mxu0
    %v827 = vadd.f32 %v551, %v826
    %v828 = vpop.f32.mrf.mxu0
    %v829 = vadd.f32 %v551, %v828
    %830 = vmatmul.bf16.gmra.mxu0 %v504
    %v831 = vpop.f32.mrf.mxu0
    %v832 = vadd.f32 %v551, %v831
    %v833 = vpop.f32.mrf.mxu0
    %v834 = vadd.f32 %v551, %v833
    %835 = vmatmul.bf16.gmra.mxu0 %v506
    %v836 = vpop.f32.mrf.mxu0
    %v837 = vadd.f32 %v551, %v836
    %v838 = vpop.f32.mrf.mxu0
    %v839 = vadd.f32 %v551, %v838
    %840 = vmatmul.bf16.gmra.mxu0 %v508
    %v841 = vpop.f32.mrf.mxu0
    %v842 = vadd.f32 %v551, %v841
    %v843 = vpop.f32.mrf.mxu0
    %v844 = vadd.f32 %v551, %v843
    %845 = vmatmul.bf16.gmra.mxu0 %v510
    %v846 = vpop.f32.mrf.mxu0
    %v847 = vadd.f32 %v551, %v846
    %v848 = vpop.f32.mrf.mxu0
    %v849 = vadd.f32 %v551, %v848
    %850 = vmatmul.bf16.gmra.mxu0 %v512
    %v851 = vpop.f32.mrf.mxu0
    %v852 = vadd.f32 %v551, %v851
    %v853 = vpop.f32.mrf.mxu0
    %v854 = vadd.f32 %v551, %v853
    %855 = vmatmul.bf16.gmra.mxu0 %v514
    %v856 = vpop.f32.mrf.mxu0
    %v857 = vadd.f32 %v551, %v856
    %v858 = vpop.f32.mrf.mxu0
    %v859 = vadd.f32 %v551, %v858
    %860 = vdwg.mxu0
    %861 = vmatpush.bf16.msra.mxu0 %v681
    %862 = vmatpush.bf16.msra.mxu0 %v679
    %863 = vmatpush.bf16.msra.mxu0 %v677
    %864 = vmatpush.bf16.msra.mxu0 %v675
    %865 = vmatpush.bf16.msra.mxu0 %v673
    %866 = vmatpush.bf16.msra.mxu0 %v671
    %867 = vmatpush.bf16.msra.mxu0 %v669
    %868 = vmatpush.bf16.msra.mxu0 %v667
    %869 = vmatmul.bf16.gmra.mxu0 %v501
    %v870 = vpop.f32.mrf.mxu0
    %v871 = vadd.f32 %v822, %v870
    %v872 = vpop.f32.mrf.mxu0
    %v873 = vadd.f32 %v824, %v872
    %874 = vmatmul.bf16.gmra.mxu0 %v503
    %v875 = vpop.f32.mrf.mxu0
    %v876 = vadd.f32 %v827, %v875
    %v877 = vpop.f32.mrf.mxu0
    %v878 = vadd.f32 %v829, %v877
    %879 = vmatmul.bf16.gmra.mxu0 %v505
    %v880 = vpop.f32.mrf.mxu0
    %v881 = vadd.f32 %v832, %v880
    %v882 = vpop.f32.mrf.mxu0
    %v883 = vadd.f32 %v834, %v882
    %884 = vmatmul.bf16.gmra.mxu0 %v507
    %v885 = vpop.f32.mrf.mxu0
    %v886 = vadd.f32 %v837, %v885
    %v887 = vpop.f32.mrf.mxu0
    %v888 = vadd.f32 %v839, %v887
    %889 = vmatmul.bf16.gmra.mxu0 %v509
    %v890 = vpop.f32.mrf.mxu0
    %v891 = vadd.f32 %v842, %v890
    %v892 = vpop.f32.mrf.mxu0
    %v893 = vadd.f32 %v844, %v892
    %894 = vmatmul.bf16.gmra.mxu0 %v511
    %v895 = vpop.f32.mrf.mxu0
    %v896 = vadd.f32 %v847, %v895
    %v897 = vpop.f32.mrf.mxu0
    %v898 = vadd.f32 %v849, %v897
    %899 = vmatmul.bf16.gmra.mxu0 %v513
    %v900 = vpop.f32.mrf.mxu0
    %v901 = vadd.f32 %v852, %v900
    %v902 = vpop.f32.mrf.mxu0
    %v903 = vadd.f32 %v854, %v902
    %904 = vmatmul.bf16.gmra.mxu0 %v515
    %v905 = vpop.f32.mrf.mxu0
    %v906 = vadd.f32 %v857, %v905
    %v907 = vpop.f32.mrf.mxu0
    %v908 = vadd.f32 %v859, %v907
    %909 = vdwg.mxu0
    %v910 = vmax.f32 %v773, 0.0
    %v911 = vmax.f32 %v871, 0.0
    %v912 = vmax.f32 %v775, 0.0
    %v913 = vmax.f32 %v873, 0.0
    %v914 = vmax.f32 %v778, 0.0
    %v915 = vmax.f32 %v876, 0.0
    %v916 = vmax.f32 %v780, 0.0
    %v917 = vmax.f32 %v878, 0.0
    %v918 = vmax.f32 %v783, 0.0
    %v919 = vmax.f32 %v881, 0.0
    %v920 = vmax.f32 %v785, 0.0
    %v921 = vmax.f32 %v883, 0.0
    %v922 = vmax.f32 %v788, 0.0
    %v923 = vmax.f32 %v886, 0.0
    %v924 = vmax.f32 %v790, 0.0
    %v925 = vmax.f32 %v888, 0.0
    %v926 = vmax.f32 %v793, 0.0
    %v927 = vmax.f32 %v891, 0.0
    %v928 = vmax.f32 %v795, 0.0
    %v929 = vmax.f32 %v893, 0.0
    %v930 = vmax.f32 %v798, 0.0
    %v931 = vmax.f32 %v896, 0.0
    %v932 = vmax.f32 %v800, 0.0
    %v933 = vmax.f32 %v898, 0.0
    %v934 = vmax.f32 %v803, 0.0
    %v935 = vmax.f32 %v901, 0.0
    %v936 = vmax.f32 %v805, 0.0
    %v937 = vmax.f32 %v903, 0.0
    %v938 = vmax.f32 %v808, 0.0
    %v939 = vmax.f32 %v906, 0.0
    %v940 = vmax.f32 %v810, 0.0
    %v941 = vmax.f32 %v908, 0.0
    %v942 = vld [vmem:[%s7] sm:$0x3]
    %v944 = vperm.slane %v942, 0
    %v945 = vperm.slane %v942, 1
    %v948 = vmul.f32 %v910, %v944
    %v949 = vmul.f32 %v911, %v945
    %v950 = vmul.f32 %v912, %v944
    %v951 = vmul.f32 %v913, %v945
    %v952 = vmul.f32 %v914, %v944
    %v953 = vmul.f32 %v915, %v945
    %v954 = vmul.f32 %v916, %v944
    %v955 = vmul.f32 %v917, %v945
    %v956 = vmul.f32 %v918, %v944
    %v957 = vmul.f32 %v919, %v945
    %v958 = vmul.f32 %v920, %v944
    %v959 = vmul.f32 %v921, %v945
    %v960 = vmul.f32 %v922, %v944
    %v961 = vmul.f32 %v923, %v945
    %v962 = vmul.f32 %v924, %v944
    %v963 = vmul.f32 %v925, %v945
    %v964 = vmul.f32 %v926, %v944
    %v965 = vmul.f32 %v927, %v945
    %v966 = vmul.f32 %v928, %v944
    %v967 = vmul.f32 %v929, %v945
    %v968 = vmul.f32 %v930, %v944
    %v969 = vmul.f32 %v931, %v945
    %v970 = vmul.f32 %v932, %v944
    %v971 = vmul.f32 %v933, %v945
    %v972 = vmul.f32 %v934, %v944
    %v973 = vmul.f32 %v935, %v945
    %v974 = vmul.f32 %v936, %v944
    %v975 = vmul.f32 %v937, %v945
    %v976 = vmul.f32 %v938, %v944
    %v977 = vmul.f32 %v939, %v945
    %v978 = vmul.f32 %v940, %v944
    %v979 = vmul.f32 %v941, %v945
    %v980 = vadd.f32 %v948, %v949
    %v981 = vadd.f32 %v950, %v951
    %v982 = vadd.f32 %v952, %v953
    %v983 = vadd.f32 %v954, %v955
    %v984 = vadd.f32 %v956, %v957
    %v985 = vadd.f32 %v958, %v959
    %v986 = vadd.f32 %v960, %v961
    %v987 = vadd.f32 %v962, %v963
    %v988 = vadd.f32 %v964, %v965
    %v989 = vadd.f32 %v966, %v967
    %v990 = vadd.f32 %v968, %v969
    %v991 = vadd.f32 %v970, %v971
    %v992 = vadd.f32 %v972, %v973
    %v993 = vadd.f32 %v974, %v975
    %v994 = vadd.f32 %v976, %v977
    %v995 = vadd.f32 %v978, %v979
    %996 = vadd.xlane.f32.xlu0 %v980
    %v997 = vpop.xlane.xlu0 %996
    %998 = vadd.xlane.f32.xlu0 %v981
    %v999 = vpop.xlane.xlu0 %998
    %1000 = vadd.xlane.f32.xlu0 %v982
    %v1001 = vpop.xlane.xlu0 %1000
    %1002 = vadd.xlane.f32.xlu0 %v983
    %v1003 = vpop.xlane.xlu0 %1002
    %1004 = vadd.xlane.f32.xlu0 %v984
    %v1005 = vpop.xlane.xlu0 %1004
    %1006 = vadd.xlane.f32.xlu0 %v985
    %v1007 = vpop.xlane.xlu0 %1006
    %1008 = vadd.xlane.f32.xlu0 %v986
    %v1009 = vpop.xlane.xlu0 %1008
    %1010 = vadd.xlane.f32.xlu0 %v987
    %v1011 = vpop.xlane.xlu0 %1010
    %1012 = vadd.xlane.f32.xlu0 %v988
    %v1013 = vpop.xlane.xlu0 %1012
    %1014 = vadd.xlane.f32.xlu0 %v989
    %v1015 = vpop.xlane.xlu0 %1014
    %1016 = vadd.xlane.f32.xlu0 %v990
    %v1017 = vpop.xlane.xlu0 %1016
    %1018 = vadd.xlane.f32.xlu0 %v991
    %v1019 = vpop.xlane.xlu0 %1018
    %1020 = vadd.xlane.f32.xlu0 %v992
    %v1021 = vpop.xlane.xlu0 %1020
    %1022 = vadd.xlane.f32.xlu0 %v993
    %v1023 = vpop.xlane.xlu0 %1022
    %1024 = vadd.xlane.f32.xlu0 %v994
    %v1025 = vpop.xlane.xlu0 %1024
    %1026 = vadd.xlane.f32.xlu0 %v995
    %v1027 = vpop.xlane.xlu0 %1026
    %s1028 = sld [smem:[#allocation2]]
    %v1029 = vstv %s1028
    %v1030 = vadd.f32 %v997, %v1029
    %v1031 = vadd.f32 %v999, %v1029
    %v1032 = vadd.f32 %v1001, %v1029
    %v1033 = vadd.f32 %v1003, %v1029
    %v1034 = vadd.f32 %v1005, %v1029
    %v1035 = vadd.f32 %v1007, %v1029
    %v1036 = vadd.f32 %v1009, %v1029
    %v1037 = vadd.f32 %v1011, %v1029
    %v1038 = vadd.f32 %v1013, %v1029
    %v1039 = vadd.f32 %v1015, %v1029
    %v1040 = vadd.f32 %v1017, %v1029
    %v1041 = vadd.f32 %v1019, %v1029
    %v1042 = vadd.f32 %v1021, %v1029
    %v1043 = vadd.f32 %v1023, %v1029
    %v1044 = vadd.f32 %v1025, %v1029
    %v1045 = vadd.f32 %v1027, %v1029
    %v1046 = vlaneseq
    %v1047 = vshrl.u32 %v1046, 7
    %v1048 = vadd.s32 %v1047, 8
    %v1049 = vadd.s32 %v1047, 16
    %v1050 = vadd.s32 %v1047, 24
    %v1051 = vadd.s32 %v1047, 32
    %v1052 = vadd.s32 %v1047, 40
    %v1053 = vadd.s32 %v1047, 48
    %v1054 = vadd.s32 %v1047, 56
    %v1055 = vadd.s32 %v1047, 64
    %v1056 = vadd.s32 %v1047, 72
    %v1057 = vadd.s32 %v1047, 80
    %v1058 = vadd.s32 %v1047, 88
    %v1059 = vadd.s32 %v1047, 96
    %v1060 = vadd.s32 %v1047, 104
    %v1061 = vadd.s32 %v1047, 112
    %v1062 = vadd.s32 %v1047, 120
    %v1063 = vlaneseq
    %v1064 = vand.u32 %v1063, 127
    %vm1065 = vcmp.eq.s32.totalorder %v1047, %v1064
    %vm1066 = vcmp.eq.s32.totalorder %v1048, %v1064
    %vm1067 = vcmp.eq.s32.totalorder %v1049, %v1064
    %vm1068 = vcmp.eq.s32.totalorder %v1050, %v1064
    %vm1069 = vcmp.eq.s32.totalorder %v1051, %v1064
    %vm1070 = vcmp.eq.s32.totalorder %v1052, %v1064
    %vm1071 = vcmp.eq.s32.totalorder %v1053, %v1064
    %vm1072 = vcmp.eq.s32.totalorder %v1054, %v1064
    %vm1073 = vcmp.eq.s32.totalorder %v1055, %v1064
    %vm1074 = vcmp.eq.s32.totalorder %v1056, %v1064
    %vm1075 = vcmp.eq.s32.totalorder %v1057, %v1064
    %vm1076 = vcmp.eq.s32.totalorder %v1058, %v1064
    %vm1077 = vcmp.eq.s32.totalorder %v1059, %v1064
    %vm1078 = vcmp.eq.s32.totalorder %v1060, %v1064
    %vm1079 = vcmp.eq.s32.totalorder %v1061, %v1064
    %vm1080 = vcmp.eq.s32.totalorder %v1062, %v1064
    %v1081 = vsel %vm1065, 1, 0
    %v1082 = vsel %vm1066, 1, 0
    %v1083 = vsel %vm1067, 1, 0
    %v1084 = vsel %vm1068, 1, 0
    %v1085 = vsel %vm1069, 1, 0
    %v1086 = vsel %vm1070, 1, 0
    %v1087 = vsel %vm1071, 1, 0
    %v1088 = vsel %vm1072, 1, 0
    %v1089 = vsel %vm1073, 1, 0
    %v1090 = vsel %vm1074, 1, 0
    %v1091 = vsel %vm1075, 1, 0
    %v1092 = vsel %vm1076, 1, 0
    %v1093 = vsel %vm1077, 1, 0
    %v1094 = vsel %vm1078, 1, 0
    %v1095 = vsel %vm1079, 1, 0
    %v1096 = vsel %vm1080, 1, 0
    %v1097 = vcvt.s32.f32 %v1081
    %v1098 = vcvt.s32.f32 %v1082
    %v1099 = vcvt.s32.f32 %v1083
    %v1100 = vcvt.s32.f32 %v1084
    %v1101 = vcvt.s32.f32 %v1085
    %v1102 = vcvt.s32.f32 %v1086
    %v1103 = vcvt.s32.f32 %v1087
    %v1104 = vcvt.s32.f32 %v1088
    %v1105 = vcvt.s32.f32 %v1089
    %v1106 = vcvt.s32.f32 %v1090
    %v1107 = vcvt.s32.f32 %v1091
    %v1108 = vcvt.s32.f32 %v1092
    %v1109 = vcvt.s32.f32 %v1093
    %v1110 = vcvt.s32.f32 %v1094
    %v1111 = vcvt.s32.f32 %v1095
    %v1112 = vcvt.s32.f32 %v1096
    %v1113 = vmul.f32 %v1030, %v1097
    %v1114 = vmul.f32 %v1031, %v1098
    %v1115 = vmul.f32 %v1032, %v1099
    %v1116 = vmul.f32 %v1033, %v1100
    %v1117 = vmul.f32 %v1034, %v1101
    %v1118 = vmul.f32 %v1035, %v1102
    %v1119 = vmul.f32 %v1036, %v1103
    %v1120 = vmul.f32 %v1037, %v1104
    %v1121 = vmul.f32 %v1038, %v1105
    %v1122 = vmul.f32 %v1039, %v1106
    %v1123 = vmul.f32 %v1040, %v1107
    %v1124 = vmul.f32 %v1041, %v1108
    %v1125 = vmul.f32 %v1042, %v1109
    %v1126 = vmul.f32 %v1043, %v1110
    %v1127 = vmul.f32 %v1044, %v1111
    %v1128 = vmul.f32 %v1045, %v1112
    %v1129 = vadd.f32 %v1113, %v1114
    %v1130 = vadd.f32 %v1129, %v1115
    %v1131 = vadd.f32 %v1130, %v1116
    %v1132 = vadd.f32 %v1131, %v1117
    %v1133 = vadd.f32 %v1132, %v1118
    %v1134 = vadd.f32 %v1133, %v1119
    %v1135 = vadd.f32 %v1134, %v1120
    %v1136 = vadd.f32 %v1135, %v1121
    %v1137 = vadd.f32 %v1136, %v1122
    %v1138 = vadd.f32 %v1137, %v1123
    %v1139 = vadd.f32 %v1138, %v1124
    %v1140 = vadd.f32 %v1139, %v1125
    %v1141 = vadd.f32 %v1140, %v1126
    %v1142 = vadd.f32 %v1141, %v1127
    %v1143 = vadd.f32 %v1142, %v1128
    %v1144 = vrot.slane %v1143, 4
    %v1145 = vadd.f32 %v1143, %v1144
    %v1146 = vrot.slane %v1145, 2
    %v1147 = vadd.f32 %v1145, %v1146
    %v1148 = vrot.slane %v1147, 1
    %v1149 = vadd.f32 %v1147, %v1148
    %1150 = vst [vmem:[#allocation12] sm:$0x1] %v1149
    // Predicated region
    $region58: #{tpu_custom_call.1} parent=1 // pred_check
      _
    $region59: #{tpu_custom_call.1} parent=1 // pred_check_branch
      %1152 = sbr.rel (0) target = $region61
    $region60: #{tpu_custom_call.1} parent=1 // pred_region
      %1154 = vsyncadd [#allocation5], 0
      %s1156 = sshll.u32 [#allocation12], 4
      %s1157 = int_to_ptr.vmem [resolvable:$true] %s1156
      %s1158 = sshll.u32 %s9, 4
      %s1159 = int_to_ptr.hbm [resolvable:$true] %s1158
      %1161 = dma.vmem_to_hbm [thread:$0]  %s1157, 16, %s1159, [#allocation5]
    $region61: #{tpu_custom_call.1} parent=1 // pred_fallthru
      _
    // Predicated region
    $region62: #{tpu_custom_call.1} parent=1 // pred_check
      _
    $region63: #{tpu_custom_call.1} parent=1 // pred_check_branch
      %1163 = sbr.rel (0) target = $region65
    $region64: #{tpu_custom_call.1} parent=1 // pred_region
      %1165 = dma.done [#allocation5], 16
    $region65: #{tpu_custom_call.1} parent=1 // pred_fallthru
      _
    %1166 = vsyncpa [#allocation4], 1
    %1167 = vsyncpa [#allocation7], 1
    %1168 = vsyncpa [#allocation10], 1
    %1169 = vsyncpa [#allocation5], 1

</llo_original>
